<compile_context>
chip_gen: v5e
topology: v5e:2x2
jax: 0.10.0
libtpu: 0.0.40
codegen_flags: <defaults>
</compile_context>

<pallas_src>
import functools
import math

import jax
import jax.numpy as jnp
from jax import lax
from jax.experimental import pallas as pl
from jax.experimental.pallas import tpu as pltpu


_NBUF = 8  # depth of the row-DMA pipeline in the HBM fallback path


def _round_up(x, m):
    return ((x + m - 1) // m) * m


def _vmem_capacity_bytes():
    """Per-core VMEM capacity (128 MiB v5e/v6e, 64 MiB v7x); conservative fallback."""
    try:
        cap = getattr(pltpu.get_tpu_info(), "vmem_capacity_bytes", None)
        if cap:
            return int(cap)
    except Exception:
        pass
    return 64 * 1024 * 1024


# ------------------ fast path: VMEM-resident table, one-hot MXU ----------------
def _embedding_onehot_kernel(ids_ref,   # VMEM: (block_tokens, 1) int32
                             lut_ref,   # VMEM (resident): (vocab, d_model)
                             out_ref,   # VMEM output block: (block_tokens, d_model)
                             *, scale):
    """Gather rows via a one-hot MXU matmul against the VMEM-resident table."""
    ids = ids_ref[...]                                      # (bt, 1) int32
    bt = ids.shape[0]
    vocab = lut_ref.shape[0]
    iota = lax.broadcasted_iota(jnp.int32, (bt, vocab), 1)
    onehot = (iota == ids).astype(lut_ref.dtype)            # (bt, vocab)
    rows = jnp.dot(onehot, lut_ref[...], preferred_element_type=jnp.float32)
    out_ref[...] = (rows * scale).astype(out_ref.dtype)     # fused sqrt(d_model)


# ------------------ fallback: HBM table, deep-pipelined row DMAs ---------------
def _embedding_hbm_gather_kernel(ids_ref,   # SMEM (scalar prefetch): (n_pad,) int32
                                 lut_ref,   # HBM (pl.ANY):           (vocab, d_model)
                                 out_ref,   # VMEM output block:      (block_tokens, d_model)
                                 sems,      # DMA semaphores:         (_NBUF,)
                                 *, block_tokens, scale):
    tile = pl.program_id(0)
    base = tile * block_tokens

    def start_row(j, tok):
        pltpu.make_async_copy(
            lut_ref.at[pl.ds(tok, 1)],          # (1, d_model) row in HBM
            out_ref.at[pl.ds(j, 1)],            # straight into the output block
            sems.at[j & (_NBUF - 1)],
        ).start()

    def wait_row(j):
        # Fixed-shape wait: only the dst shape (byte count) and semaphore slot
        # matter, so no token id is re-read after the wait.
        pltpu.make_async_copy(
            lut_ref.at[pl.ds(0, 1)],
            out_ref.at[pl.ds(j, 1)],
            sems.at[j & (_NBUF - 1)],
        ).wait()

    # Prime _NBUF in-flight copies (wrapper guarantees block_tokens >= _NBUF).
    for j in range(_NBUF):
        start_row(j, ids_ref[base + j])

    def body(j, carry):
        # Hoist the SMEM id read for the next DMA above the wait (a DMA .wait()
        # stalls subsequent SMEM scalar loads).
        nxt = jnp.minimum(base + j + _NBUF, base + block_tokens - 1)
        tok_next = ids_ref[nxt]
        wait_row(j)

        @pl.when(j + _NBUF < block_tokens)
        def _():
            start_row(j + _NBUF, tok_next)

        return carry

    lax.fori_loop(0, block_tokens, body, 0, unroll=8)

    # Single lane-dense in-place pass fusing the sqrt(d_model) scale (f32 math).
    out_ref[...] = (out_ref[...].astype(jnp.float32) * scale).astype(out_ref.dtype)


# ----------------------------------- wrapper -----------------------------------
def embeddings_forward(token_ids, lut, *, block_tokens=256, force_hbm_path=False):
    """Equivalent of PyTorch Embeddings.forward: lut[token_ids] * sqrt(d_model)."""
    vocab, d_model = lut.shape
    lead_shape = token_ids.shape
    flat_ids = token_ids.reshape(-1).astype(jnp.int32)
    n = flat_ids.shape[0]
    if n == 0:
        return jnp.zeros((*lead_shape, d_model), lut.dtype)

    itemsize = jnp.dtype(lut.dtype).itemsize
    scale = math.sqrt(d_model)

    # Tile size: large enough to amortize per-step overhead, small enough that
    # each (block_tokens, d_model) output buffer stays <= ~4 MiB (safe even
    # under v5e's 16 MiB default scoped VMEM with double buffering).
    max_out_tile_bytes = 4 * 1024 * 1024
    bt_vmem_cap = max(8, (max_out_tile_bytes // max(1, d_model * itemsize)) // 8 * 8)
    block_tokens = max(8, min(_round_up(block_tokens, 8), _round_up(n, 8), bt_vmem_cap))

    num_tiles = pl.cdiv(n, block_tokens)
    n_pad = num_tiles * block_tokens
    if n_pad != n:
        # Padded slots gather row 0 and are sliced off after the kernel.
        flat_ids = jnp.pad(flat_ids, (0, n_pad - n))

    table_bytes = vocab * d_model * itemsize
    out_block_bytes = block_tokens * d_model * itemsize
    onehot_bytes = block_tokens * vocab * 4
    row_bytes = d_model * itemsize

    # Generation-aware resident-table budget: v7x has only 64 MiB VMEM
    # (vs 128 MiB on v5e/v6e) -> cap at ~1/3 capacity and never above 40 MiB.
    vmem_cap = _vmem_capacity_bytes()
    resident_budget = min(vmem_cap // 3, 40 * 1024 * 1024)
    use_resident = (not force_hbm_path
                    and table_bytes <= resident_budget
                    and vocab <= 4096                       # keep one-hot work trivial
                    and onehot_bytes <= 4 * 1024 * 1024)

    if use_resident:
        needed = 2 * table_bytes + 2 * out_block_bytes + 2 * onehot_bytes + (2 << 20)
        vmem_limit = min(int(vmem_cap * 0.9), max(needed, 32 * 1024 * 1024))
        out = pl.pallas_call(
            functools.partial(_embedding_onehot_kernel, scale=scale),
            out_shape=jax.ShapeDtypeStruct((n_pad, d_model), lut.dtype),
            grid_spec=pltpu.PrefetchScalarGridSpec(
                num_scalar_prefetch=0,
                grid=(num_tiles,),
                in_specs=[
                    pl.BlockSpec((block_tokens, 1), lambda i: (i, 0)),   # token ids
                    pl.BlockSpec((vocab, d_model), lambda i: (0, 0)),    # resident lut
                ],
                out_specs=pl.BlockSpec((block_tokens, d_model), lambda i: (i, 0)),
            ),
            compiler_params=pltpu.CompilerParams(
                dimension_semantics=("parallel",),
                vmem_limit_bytes=vmem_limit,
            ),
            cost_estimate=pl.CostEstimate(
                flops=2 * n_pad * vocab * d_model,
                transcendentals=0,
                bytes_accessed=table_bytes + n_pad * (row_bytes + 4),
            ),
        )(flat_ids.reshape(n_pad, 1), lut)
    else:
        out = pl.pallas_call(
            functools.partial(_embedding_hbm_gather_kernel,
                              block_tokens=block_tokens, scale=scale),
            out_shape=jax.ShapeDtypeStruct((n_pad, d_model), lut.dtype),
            grid_spec=pltpu.PrefetchScalarGridSpec(
                num_scalar_prefetch=1,                         # flat_ids -> SMEM
                grid=(num_tiles,),
                in_specs=[pl.BlockSpec(memory_space=pl.ANY)],  # lut stays in HBM
                out_specs=pl.BlockSpec((block_tokens, d_model),
                                       lambda i, ids: (i, 0)),
                scratch_shapes=[pltpu.SemaphoreType.DMA((_NBUF,))],
            ),
            compiler_params=pltpu.CompilerParams(
                dimension_semantics=("parallel",),
            ),
            cost_estimate=pl.CostEstimate(
                flops=n_pad * d_model,
                transcendentals=0,
                bytes_accessed=2 * n_pad * row_bytes + n_pad * 4,
            ),
        )(flat_ids, lut)

    if n_pad != n:
        # TODO(synk): could mask the tail store in-kernel to avoid this slice copy.
        out = out[:n]
    return out.reshape(*lead_shape, d_model)


# ------------------------------------- demo -------------------------------------
if __name__ == "__main__":
    VOCAB, D_MODEL = 1000, 128        # d_model multiple of 128 keeps stores lane-dense
    B, T = 2, 8

    key = jax.random.PRNGKey(0)
    k_lut, k_ids = jax.random.split(key)
    lut = 0.02 * jax.random.normal(k_lut, (VOCAB, D_MODEL), jnp.float32)
    token_ids = jax.random.randint(k_ids, (B, T), 0, VOCAB, dtype=jnp.int32)

    # Pure-JAX reference: gather + scale (matches nn.Embedding(x) * sqrt(d)).
    ref = lut[token_ids] * math.sqrt(D_MODEL)

    # Fast path: VMEM-resident table + one-hot MXU gather.
    fwd = jax.jit(functools.partial(embeddings_forward, block_tokens=256))
    out = fwd(token_ids, lut)
    jax.block_until_ready(out)
    assert out.shape == (B, T, D_MODEL) and out.dtype == jnp.float32
    assert bool(jnp.all(jnp.isfinite(out)))
    assert bool(jnp.allclose(out, ref, atol=1e-5, rtol=1e-5))

    # Fallback path: HBM table + 8-deep pipelined row DMAs into the output block
    # (also exercises the non-multiple-of-block tail handling).
    ids_ragged = jax.random.randint(k_ids, (3, 7), 0, VOCAB, dtype=jnp.int32)
    ref2 = lut[ids_ragged] * math.sqrt(D_MODEL)
    fwd_hbm = jax.jit(functools.partial(embeddings_forward,
                                        block_tokens=8, force_hbm_path=True))
    out2 = fwd_hbm(ids_ragged, lut)
    jax.block_until_ready(out2)
    assert out2.shape == (3, 7, D_MODEL) and out2.dtype == jnp.float32
    assert bool(jnp.allclose(out2, ref2, atol=1e-5, rtol=1e-5))

    print("KERNEL_OK")
</pallas_src>

<mosaic_0001>
module attributes {stable_mosaic.version = 11 : i64} {
  func.func @_embedding_onehot_kernel(%arg0: i32, %arg1: memref<16x1xi32, #tpu.memory_space<vmem>>, %arg2: memref<1000x128xf32, #tpu.memory_space<vmem>>, %arg3: memref<16x128xf32, #tpu.memory_space<vmem>>) attributes {dimension_semantics = [#tpu.dimension_semantics<parallel>], iteration_bounds = array<i64: 1>, scalar_prefetch = 0 : i64, scratch_operands = 0 : i64, tpu.core_type = #tpu.core_type<tc>, window_params = [{transform_indices = @transform_0, window_bounds = array<i64: 16, 1>}, {pipeline_mode = #tpu.pipeline_mode<synchronous>, transform_indices = @transform_1, window_bounds = array<i64: 1000, 128>}, {transform_indices = @transform_2, window_bounds = array<i64: 16, 128>}]} {
    %c0 = arith.constant 0 : index
    %c0_0 = arith.constant 0 : index
    %0 = vector.load %arg1[%c0, %c0_0] : memref<16x1xi32, #tpu.memory_space<vmem>>, vector<16x1xi32>
    %1 = tpu.iota {dimensions = array<i32: 1>} : vector<16x1000xi32>
    %2 = vector.broadcast %0 : vector<16x1xi32> to vector<16x1000xi32>
    %3 = arith.cmpi eq, %1, %2 : vector<16x1000xi32>
    %4 = arith.extui %3 : vector<16x1000xi1> to vector<16x1000xi32>
    %5 = arith.sitofp %4 : vector<16x1000xi32> to vector<16x1000xf32>
    %c0_1 = arith.constant 0 : index
    %c0_2 = arith.constant 0 : index
    %6 = vector.load %arg2[%c0_1, %c0_2] : memref<1000x128xf32, #tpu.memory_space<vmem>>, vector<1000x128xf32>
    %cst = arith.constant dense<0.000000e+00> : vector<16x128xf32>
    %7 = tpu.matmul %5, %6, %cst {dimension_numbers = #tpu.dot_dimension_numbers<[1], [0], [0], [1], [0, 0, 1, 1], [], []>} : vector<16x1000xf32>, vector<1000x128xf32>, vector<16x128xf32> -> vector<16x128xf32>
    %cst_3 = arith.constant 11.3137083 : f32
    %8 = vector.broadcast %cst_3 : f32 to vector<16x128xf32>
    %9 = arith.mulf %7, %8 : vector<16x128xf32>
    %c0_4 = arith.constant 0 : index
    %c0_5 = arith.constant 0 : index
    %10 = vector.load %arg3[%c0_4, %c0_5] : memref<16x128xf32, #tpu.memory_space<vmem>>, vector<16x128xf32>
    tpu.vector_store %arg3[%c0_4, %c0_5], %9 {strides = array<i32>} : memref<16x128xf32, #tpu.memory_space<vmem>>, vector<16x128xf32>,
    return
  }
  func.func @transform_0(%arg0: i32) -> (i32, i32) {
    %c0_i32 = arith.constant 0 : i32
    %c0_i32_0 = arith.constant 0 : i32
    return %arg0, %c0_i32 : i32, i32
  }
  func.func @transform_1(%arg0: i32) -> (i32, i32) {
    %c0_i32 = arith.constant 0 : i32
    %c0_i32_0 = arith.constant 0 : i32
    %c0_i32_1 = arith.constant 0 : i32
    return %c0_i32, %c0_i32_0 : i32, i32
  }
  func.func @transform_2(%arg0: i32) -> (i32, i32) {
    %c0_i32 = arith.constant 0 : i32
    %c0_i32_0 = arith.constant 0 : i32
    return %arg0, %c0_i32 : i32, i32
  }
}

</mosaic_0001>

<llo_original>
// kernel: embeddings_forward.1
$region0: #{embeddings_forward.1}
  #allocation0 [shape = 'u32[]', space=smem, size = 0x4, offset = 0x4, fixed_abs, tag = 'smem constant byte address 0x4 - core index']
  #allocation1 [shape = 'u32[72,128]{1,0:T(1,128)}', space=vmem, size = 0x9000, scoped, tag = 'internal scratch']
  %s0 = inlined_call_operand.vmem [shape: s32[16,1], index: 0, kind: input, shape index: {}]
  %s1 = inlined_call_operand.hbm [shape: f32[1000,128], index: 1, kind: input, shape index: {}]
  %s2 = inlined_call_operand.hbm [shape: f32[16,128], index: 2, kind: output, shape index: {}]
  %s3 = sld [smem:[#allocation0]]
  $region22: #{embeddings_forward.1} parent=0
    _
  %s5 = ssub.s32 1, %s3
  %s6 = scalar_select 0, %s5, %s3
  $region1: #{embeddings_forward.1} parent=0
    #allocation2 [shape = 'u8[512000]{0}', space=vmem, size = 0x7d000, scoped, tag = 'input window, operand 1, single buffered']
    #allocation3 [shape = 's32[1]{0}', space=sflag, size = 0x4, scoped, tag = 'scoped memory for embeddings_forward.1']
    #allocation4 [shape = 's32[1]{0}', space=sflag, size = 0x4, scoped, tag = 'scoped memory for embeddings_forward.1']
    #allocation5 [shape = 'u8[8192]{0}', space=vmem, size = 0x2000, scoped, tag = 'output window, operand 0, single buffered']
    %7 = vsyncpa [#allocation3], 0
    %8 = vsyncpa [#allocation4], 0
    // Predicated region
    $region2: #{embeddings_forward.1} parent=1 // pred_check
      _
    $region3: #{embeddings_forward.1} parent=1 // pred_check_branch
      %10 = sbr.rel (0) target = $region5
    $region4: #{embeddings_forward.1} parent=1 // pred_region
      _
    $region5: #{embeddings_forward.1} parent=1 // pred_fallthru
      _
    // Predicated region
    $region6: #{embeddings_forward.1} parent=1 // pred_check
      _
    $region7: #{embeddings_forward.1} parent=1 // pred_check_branch
      %12 = sbr.rel (0) target = $region9
    $region8: #{embeddings_forward.1} parent=1 // pred_region
      %14 = vsyncadd [#allocation3], 0
      %s15 = sshll.u32 %s1, 4
      %s16 = int_to_ptr.hbm [resolvable:$true] %s15
      %s17 = sshll.u32 [#allocation2], 4
      %s18 = int_to_ptr.vmem [resolvable:$true] %s17
      %23 = dma.hbm_to_vmem [thread:$0]  %s16, 16000, %s18, [#allocation3], 128, 128, 8
    $region9: #{embeddings_forward.1} parent=1 // pred_fallthru
      _
    // Predicated region
    $region10: #{embeddings_forward.1} parent=1 // pred_check
      _
    $region11: #{embeddings_forward.1} parent=1 // pred_check_branch
      %25 = sbr.rel (0) target = $region13
    $region12: #{embeddings_forward.1} parent=1 // pred_region
      %27 = dma.done [#allocation3], 16000
    $region13: #{embeddings_forward.1} parent=1 // pred_fallthru
      _
    %v28 = vld [vmem:[%s0] sm:$0xff]
    %v29 = vld [vmem:[%s0 + $0x8] sm:$0xff]
    %v30 = vlaneseq
    %v31 = vand.u32 %v30, 127
    %v32 = vadd.s32 %v31, 128
    %v33 = vadd.s32 %v31, 256
    %v34 = vadd.s32 %v31, 384
    %v35 = vadd.s32 %v31, 512
    %v36 = vadd.s32 %v31, 640
    %v37 = vadd.s32 %v31, 768
    %v38 = vadd.s32 %v31, 896
    %39 = vset.pattern.permute.xlu0 0
    %40 = vperm.xlu0 %39, %v28
    %v41 = vpop.permute.xlu0 %40
    %42 = vset.pattern.permute.xlu0 0
    %43 = vperm.xlu0 %42, %v29
    %v44 = vpop.permute.xlu0 %43
    %vm45 = vcmp.eq.s32.totalorder %v31, %v41
    %vm46 = vcmp.eq.s32.totalorder %v32, %v41
    %vm47 = vcmp.eq.s32.totalorder %v33, %v41
    %vm48 = vcmp.eq.s32.totalorder %v34, %v41
    %vm49 = vcmp.eq.s32.totalorder %v35, %v41
    %vm50 = vcmp.eq.s32.totalorder %v36, %v41
    %vm51 = vcmp.eq.s32.totalorder %v37, %v41
    %vm52 = vcmp.eq.s32.totalorder %v38, %v41
    %vm53 = vcmp.eq.s32.totalorder %v31, %v44
    %vm54 = vcmp.eq.s32.totalorder %v32, %v44
    %vm55 = vcmp.eq.s32.totalorder %v33, %v44
    %vm56 = vcmp.eq.s32.totalorder %v34, %v44
    %vm57 = vcmp.eq.s32.totalorder %v35, %v44
    %vm58 = vcmp.eq.s32.totalorder %v36, %v44
    %vm59 = vcmp.eq.s32.totalorder %v37, %v44
    %vm60 = vcmp.eq.s32.totalorder %v38, %v44
    %v61 = vsel %vm45, 1, 0
    %v62 = vsel %vm46, 1, 0
    %v63 = vsel %vm47, 1, 0
    %v64 = vsel %vm48, 1, 0
    %v65 = vsel %vm49, 1, 0
    %v66 = vsel %vm50, 1, 0
    %v67 = vsel %vm51, 1, 0
    %v68 = vsel %vm52, 1, 0
    %v69 = vsel %vm53, 1, 0
    %v70 = vsel %vm54, 1, 0
    %v71 = vsel %vm55, 1, 0
    %v72 = vsel %vm56, 1, 0
    %v73 = vsel %vm57, 1, 0
    %v74 = vsel %vm58, 1, 0
    %v75 = vsel %vm59, 1, 0
    %v76 = vsel %vm60, 1, 0
    %v77 = vcvt.s32.f32 %v61
    %v78 = vcvt.s32.f32 %v62
    %v79 = vcvt.s32.f32 %v63
    %v80 = vcvt.s32.f32 %v64
    %v81 = vcvt.s32.f32 %v65
    %v82 = vcvt.s32.f32 %v66
    %v83 = vcvt.s32.f32 %v67
    %v84 = vcvt.s32.f32 %v68
    %v85 = vcvt.s32.f32 %v69
    %v86 = vcvt.s32.f32 %v70
    %v87 = vcvt.s32.f32 %v71
    %v88 = vcvt.s32.f32 %v72
    %v89 = vcvt.s32.f32 %v73
    %v90 = vcvt.s32.f32 %v74
    %v91 = vcvt.s32.f32 %v75
    %v92 = vcvt.s32.f32 %v76
    %v93 = vld [vmem:[#allocation2] sm:$0xff]
    %v94 = vld [vmem:[#allocation2 + $0x8] sm:$0xff]
    %v95 = vld [vmem:[#allocation2 + $0x10] sm:$0xff]
    %v96 = vld [vmem:[#allocation2 + $0x18] sm:$0xff]
    %v97 = vld [vmem:[#allocation2 + $0x20] sm:$0xff]
    %v98 = vld [vmem:[#allocation2 + $0x28] sm:$0xff]
    %v99 = vld [vmem:[#allocation2 + $0x30] sm:$0xff]
    %v100 = vld [vmem:[#allocation2 + $0x38] sm:$0xff]
    %v101 = vld [vmem:[#allocation2 + $0x40] sm:$0xff]
    %v102 = vld [vmem:[#allocation2 + $0x48] sm:$0xff]
    %v103 = vld [vmem:[#allocation2 + $0x50] sm:$0xff]
    %v104 = vld [vmem:[#allocation2 + $0x58] sm:$0xff]
    %v105 = vld [vmem:[#allocation2 + $0x60] sm:$0xff]
    %v106 = vld [vmem:[#allocation2 + $0x68] sm:$0xff]
    %v107 = vld [vmem:[#allocation2 + $0x70] sm:$0xff]
    %v108 = vld [vmem:[#allocation2 + $0x78] sm:$0xff]
    %v109 = vld [vmem:[#allocation2 + $0x80] sm:$0xff]
    %v110 = vld [vmem:[#allocation2 + $0x88] sm:$0xff]
    %v111 = vld [vmem:[#allocation2 + $0x90] sm:$0xff]
    %v112 = vld [vmem:[#allocation2 + $0x98] sm:$0xff]
    %v113 = vld [vmem:[#allocation2 + $0xa0] sm:$0xff]
    %v114 = vld [vmem:[#allocation2 + $0xa8] sm:$0xff]
    %v115 = vld [vmem:[#allocation2 + $0xb0] sm:$0xff]
    %v116 = vld [vmem:[#allocation2 + $0xb8] sm:$0xff]
    %v117 = vld [vmem:[#allocation2 + $0xc0] sm:$0xff]
    %v118 = vld [vmem:[#allocation2 + $0xc8] sm:$0xff]
    %v119 = vld [vmem:[#allocation2 + $0xd0] sm:$0xff]
    %v120 = vld [vmem:[#allocation2 + $0xd8] sm:$0xff]
    %v121 = vld [vmem:[#allocation2 + $0xe0] sm:$0xff]
    %v122 = vld [vmem:[#allocation2 + $0xe8] sm:$0xff]
    %v123 = vld [vmem:[#allocation2 + $0xf0] sm:$0xff]
    %v124 = vld [vmem:[#allocation2 + $0xf8] sm:$0xff]
    %v125 = vld [vmem:[#allocation2 + $0x100] sm:$0xff]
    %v126 = vld [vmem:[#allocation2 + $0x108] sm:$0xff]
    %v127 = vld [vmem:[#allocation2 + $0x110] sm:$0xff]
    %v128 = vld [vmem:[#allocation2 + $0x118] sm:$0xff]
    %v129 = vld [vmem:[#allocation2 + $0x120] sm:$0xff]
    %v130 = vld [vmem:[#allocation2 + $0x128] sm:$0xff]
    %v131 = vld [vmem:[#allocation2 + $0x130] sm:$0xff]
    %v132 = vld [vmem:[#allocation2 + $0x138] sm:$0xff]
    %v133 = vld [vmem:[#allocation2 + $0x140] sm:$0xff]
    %v134 = vld [vmem:[#allocation2 + $0x148] sm:$0xff]
    %v135 = vld [vmem:[#allocation2 + $0x150] sm:$0xff]
    %v136 = vld [vmem:[#allocation2 + $0x158] sm:$0xff]
    %v137 = vld [vmem:[#allocation2 + $0x160] sm:$0xff]
    %v138 = vld [vmem:[#allocation2 + $0x168] sm:$0xff]
    %v139 = vld [vmem:[#allocation2 + $0x170] sm:$0xff]
    %v140 = vld [vmem:[#allocation2 + $0x178] sm:$0xff]
    %v141 = vld [vmem:[#allocation2 + $0x180] sm:$0xff]
    %v142 = vld [vmem:[#allocation2 + $0x188] sm:$0xff]
    %v143 = vld [vmem:[#allocation2 + $0x190] sm:$0xff]
    %v144 = vld [vmem:[#allocation2 + $0x198] sm:$0xff]
    %v145 = vld [vmem:[#allocation2 + $0x1a0] sm:$0xff]
    %v146 = vld [vmem:[#allocation2 + $0x1a8] sm:$0xff]
    %v147 = vld [vmem:[#allocation2 + $0x1b0] sm:$0xff]
    %v148 = vld [vmem:[#allocation2 + $0x1b8] sm:$0xff]
    %v149 = vld [vmem:[#allocation2 + $0x1c0] sm:$0xff]
    %v150 = vld [vmem:[#allocation2 + $0x1c8] sm:$0xff]
    %v151 = vld [vmem:[#allocation2 + $0x1d0] sm:$0xff]
    %v152 = vld [vmem:[#allocation2 + $0x1d8] sm:$0xff]
    %v153 = vld [vmem:[#allocation2 + $0x1e0] sm:$0xff]
    %v154 = vld [vmem:[#allocation2 + $0x1e8] sm:$0xff]
    %v155 = vld [vmem:[#allocation2 + $0x1f0] sm:$0xff]
    %v156 = vld [vmem:[#allocation2 + $0x1f8] sm:$0xff]
    %v157 = vld [vmem:[#allocation2 + $0x200] sm:$0xff]
    %v158 = vld [vmem:[#allocation2 + $0x208] sm:$0xff]
    %v159 = vld [vmem:[#allocation2 + $0x210] sm:$0xff]
    %v160 = vld [vmem:[#allocation2 + $0x218] sm:$0xff]
    %v161 = vld [vmem:[#allocation2 + $0x220] sm:$0xff]
    %v162 = vld [vmem:[#allocation2 + $0x228] sm:$0xff]
    %v163 = vld [vmem:[#allocation2 + $0x230] sm:$0xff]
    %v164 = vld [vmem:[#allocation2 + $0x238] sm:$0xff]
    %v165 = vld [vmem:[#allocation2 + $0x240] sm:$0xff]
    %v166 = vld [vmem:[#allocation2 + $0x248] sm:$0xff]
    %v167 = vld [vmem:[#allocation2 + $0x250] sm:$0xff]
    %v168 = vld [vmem:[#allocation2 + $0x258] sm:$0xff]
    %v169 = vld [vmem:[#allocation2 + $0x260] sm:$0xff]
    %v170 = vld [vmem:[#allocation2 + $0x268] sm:$0xff]
    %v171 = vld [vmem:[#allocation2 + $0x270] sm:$0xff]
    %v172 = vld [vmem:[#allocation2 + $0x278] sm:$0xff]
    %v173 = vld [vmem:[#allocation2 + $0x280] sm:$0xff]
    %v174 = vld [vmem:[#allocation2 + $0x288] sm:$0xff]
    %v175 = vld [vmem:[#allocation2 + $0x290] sm:$0xff]
    %v176 = vld [vmem:[#allocation2 + $0x298] sm:$0xff]
    %v177 = vld [vmem:[#allocation2 + $0x2a0] sm:$0xff]
    %v178 = vld [vmem:[#allocation2 + $0x2a8] sm:$0xff]
    %v179 = vld [vmem:[#allocation2 + $0x2b0] sm:$0xff]
    %v180 = vld [vmem:[#allocation2 + $0x2b8] sm:$0xff]
    %v181 = vld [vmem:[#allocation2 + $0x2c0] sm:$0xff]
    %v182 = vld [vmem:[#allocation2 + $0x2c8] sm:$0xff]
    %v183 = vld [vmem:[#allocation2 + $0x2d0] sm:$0xff]
    %v184 = vld [vmem:[#allocation2 + $0x2d8] sm:$0xff]
    %v185 = vld [vmem:[#allocation2 + $0x2e0] sm:$0xff]
    %v186 = vld [vmem:[#allocation2 + $0x2e8] sm:$0xff]
    %v187 = vld [vmem:[#allocation2 + $0x2f0] sm:$0xff]
    %v188 = vld [vmem:[#allocation2 + $0x2f8] sm:$0xff]
    %v189 = vld [vmem:[#allocation2 + $0x300] sm:$0xff]
    %v190 = vld [vmem:[#allocation2 + $0x308] sm:$0xff]
    %v191 = vld [vmem:[#allocation2 + $0x310] sm:$0xff]
    %v192 = vld [vmem:[#allocation2 + $0x318] sm:$0xff]
    %v193 = vld [vmem:[#allocation2 + $0x320] sm:$0xff]
    %v194 = vld [vmem:[#allocation2 + $0x328] sm:$0xff]
    %v195 = vld [vmem:[#allocation2 + $0x330] sm:$0xff]
    %v196 = vld [vmem:[#allocation2 + $0x338] sm:$0xff]
    %v197 = vld [vmem:[#allocation2 + $0x340] sm:$0xff]
    %v198 = vld [vmem:[#allocation2 + $0x348] sm:$0xff]
    %v199 = vld [vmem:[#allocation2 + $0x350] sm:$0xff]
    %v200 = vld [vmem:[#allocation2 + $0x358] sm:$0xff]
    %v201 = vld [vmem:[#allocation2 + $0x360] sm:$0xff]
    %v202 = vld [vmem:[#allocation2 + $0x368] sm:$0xff]
    %v203 = vld [vmem:[#allocation2 + $0x370] sm:$0xff]
    %v204 = vld [vmem:[#allocation2 + $0x378] sm:$0xff]
    %v205 = vld [vmem:[#allocation2 + $0x380] sm:$0xff]
    %v206 = vld [vmem:[#allocation2 + $0x388] sm:$0xff]
    %v207 = vld [vmem:[#allocation2 + $0x390] sm:$0xff]
    %v208 = vld [vmem:[#allocation2 + $0x398] sm:$0xff]
    %v209 = vld [vmem:[#allocation2 + $0x3a0] sm:$0xff]
    %v210 = vld [vmem:[#allocation2 + $0x3a8] sm:$0xff]
    %v211 = vld [vmem:[#allocation2 + $0x3b0] sm:$0xff]
    %v212 = vld [vmem:[#allocation2 + $0x3b8] sm:$0xff]
    %v213 = vld [vmem:[#allocation2 + $0x3c0] sm:$0xff]
    %v214 = vld [vmem:[#allocation2 + $0x3c8] sm:$0xff]
    %v215 = vld [vmem:[#allocation2 + $0x3d0] sm:$0xff]
    %v216 = vld [vmem:[#allocation2 + $0x3d8] sm:$0xff]
    %v217 = vld [vmem:[#allocation2 + $0x3e0] sm:$0xff]
    %vm218 = vcmask 850944
    %v220 = vsel %vm218, %v84, 0
    %v223 = vsel %vm218, %v92, 0
    %225 = vmatpush.msra.mxu0 %v108
    %226 = vmatpush.msra.mxu0 %v107
    %227 = vmatpush.msra.mxu0 %v106
    %228 = vmatpush.msra.mxu0 %v105
    %229 = vmatpush.msra.mxu0 %v104
    %230 = vmatpush.msra.mxu0 %v103
    %231 = vmatpush.msra.mxu0 %v102
    %232 = vmatpush.msra.mxu0 %v101
    %233 = vmatpush.msra.mxu0 %v100
    %234 = vmatpush.msra.mxu0 %v99
    %235 = vmatpush.msra.mxu0 %v98
    %236 = vmatpush.msra.mxu0 %v97
    %237 = vmatpush.msra.mxu0 %v96
    %238 = vmatpush.msra.mxu0 %v95
    %239 = vmatpush.msra.mxu0 %v94
    %240 = vmatpush.msra.mxu0 %v93
    %241 = vmatmul.f32.gmra.mxu0 %v77
    %v242 = vpop.f32.mrf.mxu0
    %v243 = vadd.f32 0.0, %v242
    %244 = vmatmul.f32.gmra.mxu0 %v85
    %v245 = vpop.f32.mrf.mxu0
    %v246 = vadd.f32 0.0, %v245
    %247 = vdwg.mxu0
    %248 = vmatpush.msra.mxu0 %v124
    %249 = vmatpush.msra.mxu0 %v123
    %250 = vmatpush.msra.mxu0 %v122
    %251 = vmatpush.msra.mxu0 %v121
    %252 = vmatpush.msra.mxu0 %v120
    %253 = vmatpush.msra.mxu0 %v119
    %254 = vmatpush.msra.mxu0 %v118
    %255 = vmatpush.msra.mxu0 %v117
    %256 = vmatpush.msra.mxu0 %v116
    %257 = vmatpush.msra.mxu0 %v115
    %258 = vmatpush.msra.mxu0 %v114
    %259 = vmatpush.msra.mxu0 %v113
    %260 = vmatpush.msra.mxu0 %v112
    %261 = vmatpush.msra.mxu0 %v111
    %262 = vmatpush.msra.mxu0 %v110
    %263 = vmatpush.msra.mxu0 %v109
    %264 = vmatmul.f32.gmra.mxu0 %v78
    %v265 = vpop.f32.mrf.mxu0
    %v266 = vadd.f32 %v243, %v265
    %267 = vmatmul.f32.gmra.mxu0 %v86
    %v268 = vpop.f32.mrf.mxu0
    %v269 = vadd.f32 %v246, %v268
    %270 = vdwg.mxu0
    %271 = vmatpush.msra.mxu0 %v140
    %272 = vmatpush.msra.mxu0 %v139
    %273 = vmatpush.msra.mxu0 %v138
    %274 = vmatpush.msra.mxu0 %v137
    %275 = vmatpush.msra.mxu0 %v136
    %276 = vmatpush.msra.mxu0 %v135
    %277 = vmatpush.msra.mxu0 %v134
    %278 = vmatpush.msra.mxu0 %v133
    %279 = vmatpush.msra.mxu0 %v132
    %280 = vmatpush.msra.mxu0 %v131
    %281 = vmatpush.msra.mxu0 %v130
    %282 = vmatpush.msra.mxu0 %v129
    %283 = vmatpush.msra.mxu0 %v128
    %284 = vmatpush.msra.mxu0 %v127
    %285 = vmatpush.msra.mxu0 %v126
    %286 = vmatpush.msra.mxu0 %v125
    %287 = vmatmul.f32.gmra.mxu0 %v79
    %v288 = vpop.f32.mrf.mxu0
    %v289 = vadd.f32 %v266, %v288
    %290 = vmatmul.f32.gmra.mxu0 %v87
    %v291 = vpop.f32.mrf.mxu0
    %v292 = vadd.f32 %v269, %v291
    %293 = vdwg.mxu0
    %294 = vmatpush.msra.mxu0 %v156
    %295 = vmatpush.msra.mxu0 %v155
    %296 = vmatpush.msra.mxu0 %v154
    %297 = vmatpush.msra.mxu0 %v153
    %298 = vmatpush.msra.mxu0 %v152
    %299 = vmatpush.msra.mxu0 %v151
    %300 = vmatpush.msra.mxu0 %v150
    %301 = vmatpush.msra.mxu0 %v149
    %302 = vmatpush.msra.mxu0 %v148
    %303 = vmatpush.msra.mxu0 %v147
    %304 = vmatpush.msra.mxu0 %v146
    %305 = vmatpush.msra.mxu0 %v145
    %306 = vmatpush.msra.mxu0 %v144
    %307 = vmatpush.msra.mxu0 %v143
    %308 = vmatpush.msra.mxu0 %v142
    %309 = vmatpush.msra.mxu0 %v141
    %310 = vmatmul.f32.gmra.mxu0 %v80
    %v311 = vpop.f32.mrf.mxu0
    %v312 = vadd.f32 %v289, %v311
    %313 = vmatmul.f32.gmra.mxu0 %v88
    %v314 = vpop.f32.mrf.mxu0
    %v315 = vadd.f32 %v292, %v314
    %316 = vdwg.mxu0
    %317 = vmatpush.msra.mxu0 %v172
    %318 = vmatpush.msra.mxu0 %v171
    %319 = vmatpush.msra.mxu0 %v170
    %320 = vmatpush.msra.mxu0 %v169
    %321 = vmatpush.msra.mxu0 %v168
    %322 = vmatpush.msra.mxu0 %v167
    %323 = vmatpush.msra.mxu0 %v166
    %324 = vmatpush.msra.mxu0 %v165
    %325 = vmatpush.msra.mxu0 %v164
    %326 = vmatpush.msra.mxu0 %v163
    %327 = vmatpush.msra.mxu0 %v162
    %328 = vmatpush.msra.mxu0 %v161
    %329 = vmatpush.msra.mxu0 %v160
    %330 = vmatpush.msra.mxu0 %v159
    %331 = vmatpush.msra.mxu0 %v158
    %332 = vmatpush.msra.mxu0 %v157
    %333 = vmatmul.f32.gmra.mxu0 %v81
    %v334 = vpop.f32.mrf.mxu0
    %v335 = vadd.f32 %v312, %v334
    %336 = vmatmul.f32.gmra.mxu0 %v89
    %v337 = vpop.f32.mrf.mxu0
    %v338 = vadd.f32 %v315, %v337
    %339 = vdwg.mxu0
    %340 = vmatpush.msra.mxu0 %v188
    %341 = vmatpush.msra.mxu0 %v187
    %342 = vmatpush.msra.mxu0 %v186
    %343 = vmatpush.msra.mxu0 %v185
    %344 = vmatpush.msra.mxu0 %v184
    %345 = vmatpush.msra.mxu0 %v183
    %346 = vmatpush.msra.mxu0 %v182
    %347 = vmatpush.msra.mxu0 %v181
    %348 = vmatpush.msra.mxu0 %v180
    %349 = vmatpush.msra.mxu0 %v179
    %350 = vmatpush.msra.mxu0 %v178
    %351 = vmatpush.msra.mxu0 %v177
    %352 = vmatpush.msra.mxu0 %v176
    %353 = vmatpush.msra.mxu0 %v175
    %354 = vmatpush.msra.mxu0 %v174
    %355 = vmatpush.msra.mxu0 %v173
    %356 = vmatmul.f32.gmra.mxu0 %v82
    %v357 = vpop.f32.mrf.mxu0
    %v358 = vadd.f32 %v335, %v357
    %359 = vmatmul.f32.gmra.mxu0 %v90
    %v360 = vpop.f32.mrf.mxu0
    %v361 = vadd.f32 %v338, %v360
    %362 = vdwg.mxu0
    %363 = vmatpush.msra.mxu0 %v204
    %364 = vmatpush.msra.mxu0 %v203
    %365 = vmatpush.msra.mxu0 %v202
    %366 = vmatpush.msra.mxu0 %v201
    %367 = vmatpush.msra.mxu0 %v200
    %368 = vmatpush.msra.mxu0 %v199
    %369 = vmatpush.msra.mxu0 %v198
    %370 = vmatpush.msra.mxu0 %v197
    %371 = vmatpush.msra.mxu0 %v196
    %372 = vmatpush.msra.mxu0 %v195
    %373 = vmatpush.msra.mxu0 %v194
    %374 = vmatpush.msra.mxu0 %v193
    %375 = vmatpush.msra.mxu0 %v192
    %376 = vmatpush.msra.mxu0 %v191
    %377 = vmatpush.msra.mxu0 %v190
    %378 = vmatpush.msra.mxu0 %v189
    %379 = vmatmul.f32.gmra.mxu0 %v83
    %v380 = vpop.f32.mrf.mxu0
    %v381 = vadd.f32 %v358, %v380
    %382 = vmatmul.f32.gmra.mxu0 %v91
    %v383 = vpop.f32.mrf.mxu0
    %v384 = vadd.f32 %v361, %v383
    %385 = vdwg.mxu0
    %386 = vmatpush.msra.mxu0 0.0
    %387 = vmatpush.msra.mxu0 0.0
    %388 = vmatpush.msra.mxu0 0.0
    %389 = vmatpush.msra.mxu0 %v217
    %390 = vmatpush.msra.mxu0 %v216
    %391 = vmatpush.msra.mxu0 %v215
    %392 = vmatpush.msra.mxu0 %v214
    %393 = vmatpush.msra.mxu0 %v213
    %394 = vmatpush.msra.mxu0 %v212
    %395 = vmatpush.msra.mxu0 %v211
    %396 = vmatpush.msra.mxu0 %v210
    %397 = vmatpush.msra.mxu0 %v209
    %398 = vmatpush.msra.mxu0 %v208
    %399 = vmatpush.msra.mxu0 %v207
    %400 = vmatpush.msra.mxu0 %v206
    %401 = vmatpush.msra.mxu0 %v205
    %402 = vmatmul.f32.gmra.mxu0 %v220
    %v403 = vpop.f32.mrf.mxu0
    %v404 = vadd.f32 %v381, %v403
    %405 = vmatmul.f32.gmra.mxu0 %v223
    %v406 = vpop.f32.mrf.mxu0
    %v407 = vadd.f32 %v384, %v406
    %408 = vdwg.mxu0
    %v409 = vmul.f32 %v404, 11.313708
    %v410 = vmul.f32 %v407, 11.313708
    %411 = vst [vmem:[#allocation5] sm:$0xff] %v409
    %412 = vst [vmem:[#allocation5 + $0x8] sm:$0xff] %v410
    // Predicated region
    $region14: #{embeddings_forward.1} parent=1 // pred_check
      _
    $region15: #{embeddings_forward.1} parent=1 // pred_check_branch
      %414 = sbr.rel (0) target = $region17
    $region16: #{embeddings_forward.1} parent=1 // pred_region
      %416 = vsyncadd [#allocation4], 0
      %s417 = sshll.u32 [#allocation5], 4
      %s418 = int_to_ptr.vmem [resolvable:$true] %s417
      %s419 = sshll.u32 %s2, 4
      %s420 = int_to_ptr.hbm [resolvable:$true] %s419
      %425 = dma.vmem_to_hbm [thread:$0]  %s418, 256, %s420, [#allocation4], 128, 128, 8
    $region17: #{embeddings_forward.1} parent=1 // pred_fallthru
      _
    // Predicated region
    $region18: #{embeddings_forward.1} parent=1 // pred_check
      _
    $region19: #{embeddings_forward.1} parent=1 // pred_check_branch
      %427 = sbr.rel (0) target = $region21
    $region20: #{embeddings_forward.1} parent=1 // pred_region
      %429 = dma.done [#allocation4], 256
    $region21: #{embeddings_forward.1} parent=1 // pred_fallthru
      _
    %430 = vsyncpa [#allocation3], 1
    %431 = vsyncpa [#allocation4], 1

</llo_original>
